<compile_context>
chip_gen: v7x
topology: tpu7x:2x2x1
jax: 0.10.0
libtpu: 0.0.40
codegen_flags: <defaults>
</compile_context>

<pallas_src>
import functools
import math

import jax
import jax.numpy as jnp
from jax.experimental import pallas as pl
from jax.experimental.pallas import tpu as pltpu

_LANE = 1024  # lane width: large multiple of 128 -> wide, unmasked vst + big DMAs


def _weighted_avg_kernel(param_ref, x_ref, sx_ref, o_ref):
    # param_ref: (1,) scalar in SMEM.  out = Sx + p * (x - Sx)  (== p*x + (1-p)*Sx)
    p = param_ref[0].astype(jnp.float32)
    x = x_ref[...].astype(jnp.float32)
    sx = sx_ref[...].astype(jnp.float32)
    o_ref[...] = (sx + p * (x - sx)).astype(o_ref.dtype)


def _round_up(n, m):
    return ((n + m - 1) // m) * m


@functools.partial(jax.jit, static_argnames=("tile_m",))
def weighted_average_term(param, x, sx, *, tile_m=512):
    """param: (1,) float32; x, Sx: same shape/dtype. Returns param*x + (1-param)*Sx."""
    assert x.shape == sx.shape and x.dtype == sx.dtype
    orig_shape = x.shape
    total = math.prod(orig_shape)

    # --- lane-dense 2D view (M, _LANE), zero-padding the tail if needed ---
    pad = (-total) % _LANE
    xf = x.reshape(-1)
    sxf = sx.reshape(-1)
    if pad:
        xf = jnp.pad(xf, (0, pad))
        sxf = jnp.pad(sxf, (0, pad))
    m_rows = (total + pad) // _LANE
    x2 = xf.reshape(m_rows, _LANE)
    sx2 = sxf.reshape(m_rows, _LANE)

    # --- row tile selection ---
    # ~2 MiB per f32 operand block at (512, 1024); keep >= 2 grid blocks when
    # possible so both v7x TensorCores get work; cdiv handles the ragged tail.
    if m_rows <= 8:
        tm = m_rows                      # full extent (legal for any size)
    else:
        tm = min(tile_m, _round_up(max(m_rows // 2, 1), 8))
    grid = (pl.cdiv(m_rows, tm),)

    out2 = pl.pallas_call(
        _weighted_avg_kernel,
        out_shape=jax.ShapeDtypeStruct((m_rows, _LANE), x.dtype),
        grid_spec=pltpu.PrefetchScalarGridSpec(
            num_scalar_prefetch=0,
            grid=grid,
            in_specs=[
                pl.BlockSpec(memory_space=pltpu.SMEM),         # scalar param
                pl.BlockSpec((tm, _LANE), lambda i: (i, 0)),   # x tile
                pl.BlockSpec((tm, _LANE), lambda i: (i, 0)),   # Sx tile
            ],
            out_specs=pl.BlockSpec((tm, _LANE), lambda i: (i, 0)),
        ),
        compiler_params=pltpu.CompilerParams(
            dimension_semantics=("parallel",),
        ),
    )(param, x2, sx2)

    out_flat = out2.reshape(-1)
    if pad:
        out_flat = out_flat[:total]
    return out_flat.reshape(orig_shape)


def _ref(param, x, sx):
    return param[0] * x + (1.0 - param[0]) * sx


if __name__ == "__main__":
    key = jax.random.PRNGKey(0)
    kx, ksx = jax.random.split(key)

    # Primary shape: matches the module's expected NCHW usage at small size.
    B, C, H, W = 2, 4, 16, 16
    x = jax.random.normal(kx, (B, C, H, W), dtype=jnp.float32)
    sx = jax.random.normal(ksx, (B, C, H, W), dtype=jnp.float32)

    # Init matching torch.nn.Parameter(torch.ones(1)).
    param_ones = jnp.ones((1,), dtype=jnp.float32)
    out = weighted_average_term(param_ones, x, sx)
    out = jax.block_until_ready(out)
    assert out.shape == x.shape
    assert jnp.allclose(out, _ref(param_ones, x, sx), atol=1e-5), "mismatch (param=1)"

    # Non-trivial blend weight to actually exercise both terms.
    param_blend = jnp.full((1,), 0.3, dtype=jnp.float32)
    out_b = jax.block_until_ready(weighted_average_term(param_blend, x, sx))
    assert jnp.allclose(out_b, _ref(param_blend, x, sx), atol=1e-5), "mismatch (param=0.3)"

    # Odd shape: exercises lane padding + cdiv grid with a partial row block.
    k2x, k2s = jax.random.split(jax.random.PRNGKey(0), 2)
    x_odd = jax.random.normal(k2x, (1, 10, 32, 32), dtype=jnp.float32)   # 10240 elems
    sx_odd = jax.random.normal(k2s, (1, 10, 32, 32), dtype=jnp.float32)
    out_odd = jax.block_until_ready(weighted_average_term(param_blend, x_odd, sx_odd))
    assert jnp.allclose(out_odd, _ref(param_blend, x_odd, sx_odd), atol=1e-5), "mismatch (odd)"

    print("KERNEL_OK")
</pallas_src>

<mosaic_0001>
module attributes {stable_mosaic.version = 11 : i64} {
  func.func @_weighted_avg_kernel(%arg0: i32, %arg1: memref<1xf32, #tpu.memory_space<smem>>, %arg2: memref<2x1024xf32, #tpu.memory_space<vmem>>, %arg3: memref<2x1024xf32, #tpu.memory_space<vmem>>, %arg4: memref<2x1024xf32, #tpu.memory_space<vmem>>) attributes {dimension_semantics = [#tpu.dimension_semantics<parallel>], iteration_bounds = array<i64: 1>, scalar_prefetch = 0 : i64, scratch_operands = 0 : i64, tpu.core_type = #tpu.core_type<tc>, window_params = [{transform_indices = @transform_0, window_bounds = array<i64: 1>}, {transform_indices = @transform_1, window_bounds = array<i64: 2, 1024>}, {transform_indices = @transform_2, window_bounds = array<i64: 2, 1024>}, {transform_indices = @transform_3, window_bounds = array<i64: 2, 1024>}]} {
    %c0 = arith.constant 0 : index
    %0 = memref.load %arg1[%c0] : memref<1xf32, #tpu.memory_space<smem>>
    %c0_0 = arith.constant 0 : index
    %c0_1 = arith.constant 0 : index
    %1 = vector.load %arg2[%c0_0, %c0_1] : memref<2x1024xf32, #tpu.memory_space<vmem>>, vector<2x1024xf32>
    %c0_2 = arith.constant 0 : index
    %c0_3 = arith.constant 0 : index
    %2 = vector.load %arg3[%c0_2, %c0_3] : memref<2x1024xf32, #tpu.memory_space<vmem>>, vector<2x1024xf32>
    %3 = arith.subf %1, %2 : vector<2x1024xf32>
    %4 = vector.broadcast %0 : f32 to vector<2x1024xf32>
    %5 = arith.mulf %4, %3 : vector<2x1024xf32>
    %6 = arith.addf %2, %5 : vector<2x1024xf32>
    %c0_4 = arith.constant 0 : index
    %c0_5 = arith.constant 0 : index
    %7 = vector.load %arg4[%c0_4, %c0_5] : memref<2x1024xf32, #tpu.memory_space<vmem>>, vector<2x1024xf32>
    tpu.vector_store %arg4[%c0_4, %c0_5], %6 {strides = array<i32>} : memref<2x1024xf32, #tpu.memory_space<vmem>>, vector<2x1024xf32>,
    return
  }
  func.func @transform_0(%arg0: i32) -> i32 {
    %c0_i32 = arith.constant 0 : i32
    %c0_i32_0 = arith.constant 0 : i32
    return %c0_i32 : i32
  }
  func.func @transform_1(%arg0: i32) -> (i32, i32) {
    %c0_i32 = arith.constant 0 : i32
    %c0_i32_0 = arith.constant 0 : i32
    return %arg0, %c0_i32 : i32, i32
  }
  func.func @transform_2(%arg0: i32) -> (i32, i32) {
    %c0_i32 = arith.constant 0 : i32
    %c0_i32_0 = arith.constant 0 : i32
    return %arg0, %c0_i32 : i32, i32
  }
  func.func @transform_3(%arg0: i32) -> (i32, i32) {
    %c0_i32 = arith.constant 0 : i32
    %c0_i32_0 = arith.constant 0 : i32
    return %arg0, %c0_i32 : i32, i32
  }
}

</mosaic_0001>

<llo_original>
// kernel: weighted_average_term.1
$region0: #{weighted_average_term.1}
  #allocation0 [shape = 'u32[]', space=smem, size = 0x4, offset = 0x4, fixed_abs, tag = 'smem constant byte address 0x4 - core index']
  #allocation1 [shape = 'u32[144,128]{1,0:T(1,128)}', space=vmem, size = 0x12000, scoped, tag = 'internal scratch']
  #allocation2 [shape = 'f32[1]{0:T(128)S(6)}', space=smem, size = 0x200, scoped, tag = 'scoped memory for weighted_average_term.1']
  %s0 = inlined_call_operand.<no memory space> [shape: f32[1], index: 0, kind: input, shape index: {}]
  %s1 = inlined_call_operand.vmem [shape: f32[2,1024], index: 1, kind: input, shape index: {}]
  %s2 = inlined_call_operand.vmem [shape: f32[2,1024], index: 2, kind: input, shape index: {}]
  %s3 = inlined_call_operand.vmem [shape: f32[2,1024], index: 3, kind: output, shape index: {}]
  %s4 = sld [smem:[#allocation0]]
  $region22: #{weighted_average_term.1} parent=0
    _
  %s6 = ssub.s32 1, %s4
  %s7 = scalar_select 0, %s6, %s4
  %8 = sst [smem:[#allocation2]] %s0
  // Predicated region
  $region2: #{weighted_average_term.1} parent=0 // pred_check
    _
  $region3: #{weighted_average_term.1} parent=0 // pred_check_branch
    %10 = sbr.rel (0) target = $region5
  $region4: #{weighted_average_term.1} parent=0 // pred_region
    _
  $region5: #{weighted_average_term.1} parent=0 // pred_fallthru
    _
  // Predicated region
  $region6: #{weighted_average_term.1} parent=0 // pred_check
    _
  $region7: #{weighted_average_term.1} parent=0 // pred_check_branch
    %12 = sbr.rel (0) target = $region9
  $region8: #{weighted_average_term.1} parent=0 // pred_region
    _
  $region9: #{weighted_average_term.1} parent=0 // pred_fallthru
    _
  // Predicated region
  $region10: #{weighted_average_term.1} parent=0 // pred_check
    _
  $region11: #{weighted_average_term.1} parent=0 // pred_check_branch
    %14 = sbr.rel (0) target = $region13
  $region12: #{weighted_average_term.1} parent=0 // pred_region
    _
  $region13: #{weighted_average_term.1} parent=0 // pred_fallthru
    _
  %s15 = sld [smem:[#allocation2]]
  %v16 = vld [vmem:[%s1] sm:$0xff]
  %v17 = vld [vmem:[%s1 + $0x8] sm:$0xff]
  %v18 = vld [vmem:[%s2] sm:$0xff]
  %v19 = vld [vmem:[%s2 + $0x8] sm:$0xff]
  %v20 = vsub.f32 %v16, %v18
  %v21 = vsub.f32 %v17, %v19
  %v22 = vstv %s15
  %v23 = vmul.f32 %v22, %v20
  %v24 = vmul.f32 %v22, %v21
  %v25 = vadd.f32 %v18, %v23
  %v26 = vadd.f32 %v19, %v24
  %27 = vst [vmem:[%s3] sm:$0xff] %v25
  %28 = vst [vmem:[%s3 + $0x8] sm:$0xff] %v26
  // Predicated region
  $region14: #{weighted_average_term.1} parent=0 // pred_check
    _
  $region15: #{weighted_average_term.1} parent=0 // pred_check_branch
    %30 = sbr.rel (0) target = $region17
  $region16: #{weighted_average_term.1} parent=0 // pred_region
    _
  $region17: #{weighted_average_term.1} parent=0 // pred_fallthru
    _
  // Predicated region
  $region18: #{weighted_average_term.1} parent=0 // pred_check
    _
  $region19: #{weighted_average_term.1} parent=0 // pred_check_branch
    %32 = sbr.rel (0) target = $region21
  $region20: #{weighted_average_term.1} parent=0 // pred_region
    _
  $region21: #{weighted_average_term.1} parent=0 // pred_fallthru
    _

</llo_original>
